<compile_context>
chip_gen: v7x
topology: tpu7x:2x2x1
jax: 0.10.0
libtpu: 0.0.40
codegen_flags: <defaults>
</compile_context>

<pallas_src>
import math

import jax
import jax.numpy as jnp
from jax.experimental import pallas as pl
from jax.experimental.pallas import tpu as pltpu

SLOPE = 0.1     # xtanh slope (cleanIVAE default)
PACK = 128      # lane-dense slab width (input and output)


def _xtanh(h):
    return jnp.tanh(h) + SLOPE * h


def _round_up(x, m):
    return ((x + m - 1) // m) * m


# ----------------------------- fused Pallas kernel ---------------------------

def _make_fused_kernel(data_dim, aux_dim, latent_dim, pack_out):
    D, A, L = data_dim, aux_dim, latent_dim

    def kernel(in_ref,                                  # (tb, pack_in) [x | u | eps | 0]
               ew0, eb0, ew1, eb1, ew2, eb2,            # fused encoder+prior stack
               fw0, fb0, fw1, fb1, fw2, fb2,            # decoder f MLP
               o_ref):
        xs = in_ref[...]                                # f32
        xb = xs.astype(jnp.bfloat16)                    # bf16 MXU operand
        eps = xs[:, D + A:D + A + L]                    # f32

        # Fused encoder + prior: one MXU pass per layer (3 total).
        h = _xtanh(jnp.dot(xb, ew0[...],
                           preferred_element_type=jnp.float32) + eb0[...])
        h = _xtanh(jnp.dot(h.astype(jnp.bfloat16), ew1[...],
                           preferred_element_type=jnp.float32) + eb1[...])
        enc = jnp.dot(h.astype(jnp.bfloat16), ew2[...],
                      preferred_element_type=jnp.float32) + eb2[...]
        # enc lanes: [ s_mean (L) | log_var (L) | log_l (L) ]
        s_mean = enc[:, 0:L]
        log_var = enc[:, L:2 * L]
        l = jnp.exp(enc[:, 2 * L:3 * L])

        # std = exp(0.5*logvar): drops sqrt from the EUP chain; s_var = std*std (VPU).
        std = jnp.exp(0.5 * log_var)
        s_var = std * std
        s_hat = s_mean + eps * std

        # Decoder MLP.
        h = _xtanh(jnp.dot(s_hat.astype(jnp.bfloat16), fw0[...],
                           preferred_element_type=jnp.float32) + fb0[...])
        h = _xtanh(jnp.dot(h.astype(jnp.bfloat16), fw1[...],
                           preferred_element_type=jnp.float32) + fb1[...])
        x_hat = jnp.dot(h.astype(jnp.bfloat16), fw2[...],
                        preferred_element_type=jnp.float32) + fb2[...]

        # Single unmasked lane-dense store: [ x_hat | s_mean | s_var | s_hat | l | 0 ].
        pieces = [x_hat, s_mean, s_var, s_hat, l]
        used = D + 4 * L
        if pack_out > used:
            pieces.append(jnp.zeros((x_hat.shape[0], pack_out - used), jnp.float32))
        o_ref[...] = jnp.concatenate(pieces, axis=-1)

    return kernel


# ------------------------------ wrapper helpers -------------------------------

def _pick_batch_tile(batch):
    """Batch tile: multiple of 8, <= 512, and >= 2 grid steps once batch >= 16
    so v7x's second TensorCore gets work (v5e/v6e unaffected)."""
    if batch < 16:
        return _round_up(max(batch, 1), 8)
    half = -(-batch // 2)
    return min(512, _round_up(half, 8))


def _fuse_encoder_params(params, data_dim, aux_dim, latent_dim, hidden_dim, pack_in):
    """Fuse logl / z_mean / z_log_var into wide + block-diagonal weight stacks."""
    D, A, L, H = data_dim, aux_dim, latent_dim, hidden_dim
    lw0, lb0, lw1, lb1, lw2, lb2 = params["logl"]
    mw0, mb0, mw1, mb1, mw2, mb2 = params["z_mean"]
    vw0, vb0, vw1, vb1, vw2, vb2 = params["z_log_var"]

    # Layer 0: rows = packed input lanes [x | u | eps | pad]; eps/pad rows stay 0.
    ew0 = jnp.zeros((pack_in, 3 * H), jnp.float32)
    ew0 = ew0.at[0:D + A, 0:H].set(mw0)
    ew0 = ew0.at[0:D + A, H:2 * H].set(vw0)
    ew0 = ew0.at[D:D + A, 2 * H:3 * H].set(lw0)
    eb0 = jnp.concatenate([mb0, vb0, lb0], axis=-1)

    # Layer 1: block-diagonal (3H, 3H).
    ew1 = jnp.zeros((3 * H, 3 * H), jnp.float32)
    ew1 = ew1.at[0:H, 0:H].set(mw1)
    ew1 = ew1.at[H:2 * H, H:2 * H].set(vw1)
    ew1 = ew1.at[2 * H:3 * H, 2 * H:3 * H].set(lw1)
    eb1 = jnp.concatenate([mb1, vb1, lb1], axis=-1)

    # Layer 2: block-diagonal (3H, 3L); output lanes = [s_mean | log_var | log_l].
    ew2 = jnp.zeros((3 * H, 3 * L), jnp.float32)
    ew2 = ew2.at[0:H, 0:L].set(mw2)
    ew2 = ew2.at[H:2 * H, L:2 * L].set(vw2)
    ew2 = ew2.at[2 * H:3 * H, 2 * L:3 * L].set(lw2)
    eb2 = jnp.concatenate([mb2, vb2, lb2], axis=-1)

    return ew0, eb0, ew1, eb1, ew2, eb2


# ------------------------------ forward wrapper --------------------------------

def clean_ivae_forward(params, x, u, eps):
    """Fused forward pass. eps ~ N(0,1) with shape (batch, latent_dim)."""
    batch, data_dim = x.shape
    aux_dim = u.shape[1]
    latent_dim = eps.shape[1]
    hidden_dim = params["logl"][0].shape[1]
    D, A, L, H = data_dim, aux_dim, latent_dim, hidden_dim

    pack_in = _round_up(D + A + L, PACK)
    pack_out = _round_up(D + 4 * L, PACK)

    tb = _pick_batch_tile(batch)
    padded = _round_up(batch, tb)
    grid = (padded // tb,)

    # Lane-dense input slab [x | u | eps | 0]; zero rows pad irregular batches.
    slab = jnp.zeros((padded, pack_in), jnp.float32)
    slab = slab.at[:batch, 0:D].set(x.astype(jnp.float32))
    slab = slab.at[:batch, D:D + A].set(u.astype(jnp.float32))
    slab = slab.at[:batch, D + A:D + A + L].set(eps.astype(jnp.float32))

    ew0, eb0, ew1, eb1, ew2, eb2 = _fuse_encoder_params(params, D, A, L, H, pack_in)
    fw0, fb0, fw1, fb1, fw2, fb2 = params["f"]

    # bf16 MXU operands; biases / elementwise math stay f32 (v5e-safe).
    weights = (ew0.astype(jnp.bfloat16), eb0,
               ew1.astype(jnp.bfloat16), eb1,
               ew2.astype(jnp.bfloat16), eb2,
               fw0.astype(jnp.bfloat16), fb0,
               fw1.astype(jnp.bfloat16), fb1,
               fw2.astype(jnp.bfloat16), fb2)

    in_specs = ([pl.BlockSpec((tb, pack_in), lambda i: (i, 0))]
                + [pl.BlockSpec(w.shape, lambda i: (0, 0)) for w in weights])
    out_spec = pl.BlockSpec((tb, pack_out), lambda i: (i, 0))

    # Advisory cost estimate for XLA scheduling.
    layer_dims = [(pack_in, 3 * H), (3 * H, 3 * H), (3 * H, 3 * L),
                  (L, H), (H, H), (H, D)]
    flops = 2 * padded * sum(i * o for i, o in layer_dims)
    transcendentals = padded * (8 * H + 2 * L)                 # tanh + exp
    weight_bytes = sum(int(w.size) * w.dtype.itemsize for w in weights)
    bytes_accessed = weight_bytes + 4 * padded * (pack_in + pack_out)

    # VMEM budget from actual footprint (double-buffered slabs + weights) + headroom.
    footprint = 2 * tb * (pack_in + pack_out) * 4 + 2 * weight_bytes
    vmem_limit = int(min(max(footprint + (8 << 20), 16 << 20), 64 << 20))

    kernel = _make_fused_kernel(D, A, L, pack_out)

    out = pl.pallas_call(
        kernel,
        out_shape=jax.ShapeDtypeStruct((padded, pack_out), jnp.float32),
        grid=grid,
        in_specs=in_specs,
        out_specs=out_spec,
        compiler_params=pltpu.CompilerParams(
            dimension_semantics=("parallel",),
            vmem_limit_bytes=vmem_limit),
        cost_estimate=pl.CostEstimate(flops=int(flops),
                                      transcendentals=int(transcendentals),
                                      bytes_accessed=int(bytes_accessed)),
    )(slab, *weights)

    x_hat = out[:batch, 0:D]
    s_mean = out[:batch, D:D + L]
    s_var = out[:batch, D + L:D + 2 * L]
    s_hat = out[:batch, D + 2 * L:D + 3 * L]
    l = out[:batch, D + 3 * L:D + 4 * L]
    z_hat = None   # obs_layers is None in the default cleanIVAE config
    return x_hat, s_mean, s_var, s_hat, l, z_hat


# ------------------------------ pure-JAX reference -----------------------------

def _mlp3_ref(p, h):
    w0, b0, w1, b1, w2, b2 = p
    h = _xtanh(h @ w0 + b0)
    h = _xtanh(h @ w1 + b1)
    return h @ w2 + b2


def clean_ivae_reference(params, x, u, eps):
    xu = jnp.concatenate([x, u], axis=-1)
    l = jnp.exp(_mlp3_ref(params["logl"], u))
    s_mean = _mlp3_ref(params["z_mean"], xu)
    s_var = jnp.exp(_mlp3_ref(params["z_log_var"], xu))
    s_hat = s_mean + eps * jnp.sqrt(s_var)
    x_hat = _mlp3_ref(params["f"], s_hat)
    return x_hat, s_mean, s_var, s_hat, l, None


# ------------------------------ parameter init --------------------------------

def init_linear(key, in_dim, out_dim):
    """Deterministic init mimicking torch.nn.Linear default (uniform +/- 1/sqrt(in))."""
    kw, kb = jax.random.split(key)
    bound = 1.0 / math.sqrt(in_dim)
    w = jax.random.uniform(kw, (in_dim, out_dim), minval=-bound, maxval=bound,
                           dtype=jnp.float32)
    b = jax.random.uniform(kb, (1, out_dim), minval=-bound, maxval=bound,
                           dtype=jnp.float32)
    return w, b


def init_mlp3(key, in_dim, hidden_dim, out_dim):
    k0, k1, k2 = jax.random.split(key, 3)
    w0, b0 = init_linear(k0, in_dim, hidden_dim)
    w1, b1 = init_linear(k1, hidden_dim, hidden_dim)
    w2, b2 = init_linear(k2, hidden_dim, out_dim)
    return (w0, b0, w1, b1, w2, b2)


def init_clean_ivae_params(key, data_dim, latent_dim, aux_dim, hidden_dim):
    k_logl, k_zmean, k_zlogvar, k_f = jax.random.split(key, 4)
    return {
        "logl":      init_mlp3(k_logl,    aux_dim,            hidden_dim, latent_dim),
        "z_mean":    init_mlp3(k_zmean,   data_dim + aux_dim, hidden_dim, latent_dim),
        "z_log_var": init_mlp3(k_zlogvar, data_dim + aux_dim, hidden_dim, latent_dim),
        "f":         init_mlp3(k_f,       latent_dim,         hidden_dim, data_dim),
    }


# ------------------------------ main ------------------------------------------

if __name__ == "__main__":
    data_dim, latent_dim, aux_dim, hidden_dim = 16, 8, 4, 32
    batch = 8

    key = jax.random.PRNGKey(0)
    k_x, k_u, k_params, k_eps = jax.random.split(key, 4)

    x = jax.random.normal(k_x, (batch, data_dim), dtype=jnp.float32)
    u = jax.random.normal(k_u, (batch, aux_dim), dtype=jnp.float32)
    # eps drawn on host (jax.random) and fed via the packed input slab.
    # TODO(synk): optionally draw eps in-kernel via pltpu.prng_seed/stateful_normal
    # (drops one input lane group but changes the RNG stream).
    eps = jax.random.normal(k_eps, (batch, latent_dim), dtype=jnp.float32)

    params = init_clean_ivae_params(k_params, data_dim, latent_dim, aux_dim, hidden_dim)

    fwd = jax.jit(clean_ivae_forward)
    x_hat, s_mean, s_var, s_hat, l, z_hat = fwd(params, x, u, eps)
    jax.block_until_ready((x_hat, s_mean, s_var, s_hat, l))

    assert x_hat.shape == (batch, data_dim)
    assert s_mean.shape == (batch, latent_dim)
    assert s_var.shape == (batch, latent_dim)
    assert s_hat.shape == (batch, latent_dim)
    assert l.shape == (batch, latent_dim)
    assert z_hat is None

    # Numerical check vs. pure-JAX f32 reference (bf16 MXU operands -> loose tol).
    ref = clean_ivae_reference(params, x, u, eps)
    for got, want in zip((x_hat, s_mean, s_var, s_hat, l), ref[:5]):
        err = float(jnp.max(jnp.abs(got - want)))
        scale = 1.0 + float(jnp.max(jnp.abs(want)))
        assert err <= 0.05 * scale, (err, scale)

    assert bool(jnp.all(jnp.isfinite(x_hat)))
    assert bool(jnp.all(s_var > 0.0)) and bool(jnp.all(l > 0.0))

    print("KERNEL_OK")
</pallas_src>

<mosaic_0001>
module attributes {stable_mosaic.version = 11 : i64} {
  func.func @kernel(%arg0: i32, %arg1: memref<8x128xf32, #tpu.memory_space<vmem>>, %arg2: memref<128x96xbf16, #tpu.memory_space<vmem>>, %arg3: memref<1x96xf32, #tpu.memory_space<vmem>>, %arg4: memref<96x96xbf16, #tpu.memory_space<vmem>>, %arg5: memref<1x96xf32, #tpu.memory_space<vmem>>, %arg6: memref<96x24xbf16, #tpu.memory_space<vmem>>, %arg7: memref<1x24xf32, #tpu.memory_space<vmem>>, %arg8: memref<8x32xbf16, #tpu.memory_space<vmem>>, %arg9: memref<1x32xf32, #tpu.memory_space<vmem>>, %arg10: memref<32x32xbf16, #tpu.memory_space<vmem>>, %arg11: memref<1x32xf32, #tpu.memory_space<vmem>>, %arg12: memref<32x16xbf16, #tpu.memory_space<vmem>>, %arg13: memref<1x16xf32, #tpu.memory_space<vmem>>, %arg14: memref<8x128xf32, #tpu.memory_space<vmem>>) attributes {dimension_semantics = [#tpu.dimension_semantics<parallel>], iteration_bounds = array<i64: 1>, scalar_prefetch = 0 : i64, scratch_operands = 0 : i64, tpu.core_type = #tpu.core_type<tc>, window_params = [{transform_indices = @transform_0, window_bounds = array<i64: 8, 128>}, {pipeline_mode = #tpu.pipeline_mode<synchronous>, transform_indices = @transform_1, window_bounds = array<i64: 128, 96>}, {pipeline_mode = #tpu.pipeline_mode<synchronous>, transform_indices = @transform_2, window_bounds = array<i64: 1, 96>}, {pipeline_mode = #tpu.pipeline_mode<synchronous>, transform_indices = @transform_3, window_bounds = array<i64: 96, 96>}, {pipeline_mode = #tpu.pipeline_mode<synchronous>, transform_indices = @transform_4, window_bounds = array<i64: 1, 96>}, {pipeline_mode = #tpu.pipeline_mode<synchronous>, transform_indices = @transform_5, window_bounds = array<i64: 96, 24>}, {pipeline_mode = #tpu.pipeline_mode<synchronous>, transform_indices = @transform_6, window_bounds = array<i64: 1, 24>}, {pipeline_mode = #tpu.pipeline_mode<synchronous>, transform_indices = @transform_7, window_bounds = array<i64: 8, 32>}, {pipeline_mode = #tpu.pipeline_mode<synchronous>, transform_indices = @transform_8, window_bounds = array<i64: 1, 32>}, {pipeline_mode = #tpu.pipeline_mode<synchronous>, transform_indices = @transform_9, window_bounds = array<i64: 32, 32>}, {pipeline_mode = #tpu.pipeline_mode<synchronous>, transform_indices = @transform_10, window_bounds = array<i64: 1, 32>}, {pipeline_mode = #tpu.pipeline_mode<synchronous>, transform_indices = @transform_11, window_bounds = array<i64: 32, 16>}, {pipeline_mode = #tpu.pipeline_mode<synchronous>, transform_indices = @transform_12, window_bounds = array<i64: 1, 16>}, {transform_indices = @transform_13, window_bounds = array<i64: 8, 128>}]} {
    %c0 = arith.constant 0 : index
    %c0_0 = arith.constant 0 : index
    %0 = vector.load %arg1[%c0, %c0_0] : memref<8x128xf32, #tpu.memory_space<vmem>>, vector<8x128xf32>
    %1 = arith.truncf %0 : vector<8x128xf32> to vector<8x128xbf16>
    %2 = vector.extract_strided_slice %0 {offsets = [0, 20], sizes = [8, 8], strides = [1, 1]} : vector<8x128xf32> to vector<8x8xf32>
    %c0_1 = arith.constant 0 : index
    %c0_2 = arith.constant 0 : index
    %3 = vector.load %arg2[%c0_1, %c0_2] : memref<128x96xbf16, #tpu.memory_space<vmem>>, vector<128x96xbf16>
    %cst = arith.constant dense<0.000000e+00> : vector<8x96xf32>
    %4 = tpu.matmul %1, %3, %cst {dimension_numbers = #tpu.dot_dimension_numbers<[1], [0], [0], [1], [0, 0, 1, 1], [], []>} : vector<8x128xbf16>, vector<128x96xbf16>, vector<8x96xf32> -> vector<8x96xf32>
    %c0_3 = arith.constant 0 : index
    %c0_4 = arith.constant 0 : index
    %5 = vector.load %arg3[%c0_3, %c0_4] : memref<1x96xf32, #tpu.memory_space<vmem>>, vector<1x96xf32>
    %6 = vector.broadcast %5 : vector<1x96xf32> to vector<8x96xf32>
    %7 = arith.addf %4, %6 : vector<8x96xf32>
    %8 = math.tanh %7 : vector<8x96xf32>
    %cst_5 = arith.constant 1.000000e-01 : f32
    %9 = vector.broadcast %cst_5 : f32 to vector<8x96xf32>
    %10 = arith.mulf %9, %7 : vector<8x96xf32>
    %11 = arith.addf %8, %10 : vector<8x96xf32>
    %12 = arith.truncf %11 : vector<8x96xf32> to vector<8x96xbf16>
    %c0_6 = arith.constant 0 : index
    %c0_7 = arith.constant 0 : index
    %13 = vector.load %arg4[%c0_6, %c0_7] : memref<96x96xbf16, #tpu.memory_space<vmem>>, vector<96x96xbf16>
    %cst_8 = arith.constant dense<0.000000e+00> : vector<8x96xf32>
    %14 = tpu.matmul %12, %13, %cst_8 {dimension_numbers = #tpu.dot_dimension_numbers<[1], [0], [0], [1], [0, 0, 1, 1], [], []>} : vector<8x96xbf16>, vector<96x96xbf16>, vector<8x96xf32> -> vector<8x96xf32>
    %c0_9 = arith.constant 0 : index
    %c0_10 = arith.constant 0 : index
    %15 = vector.load %arg5[%c0_9, %c0_10] : memref<1x96xf32, #tpu.memory_space<vmem>>, vector<1x96xf32>
    %16 = vector.broadcast %15 : vector<1x96xf32> to vector<8x96xf32>
    %17 = arith.addf %14, %16 : vector<8x96xf32>
    %18 = math.tanh %17 : vector<8x96xf32>
    %cst_11 = arith.constant 1.000000e-01 : f32
    %19 = vector.broadcast %cst_11 : f32 to vector<8x96xf32>
    %20 = arith.mulf %19, %17 : vector<8x96xf32>
    %21 = arith.addf %18, %20 : vector<8x96xf32>
    %22 = arith.truncf %21 : vector<8x96xf32> to vector<8x96xbf16>
    %c0_12 = arith.constant 0 : index
    %c0_13 = arith.constant 0 : index
    %23 = vector.load %arg6[%c0_12, %c0_13] : memref<96x24xbf16, #tpu.memory_space<vmem>>, vector<96x24xbf16>
    %cst_14 = arith.constant dense<0.000000e+00> : vector<8x24xf32>
    %24 = tpu.matmul %22, %23, %cst_14 {dimension_numbers = #tpu.dot_dimension_numbers<[1], [0], [0], [1], [0, 0, 1, 1], [], []>} : vector<8x96xbf16>, vector<96x24xbf16>, vector<8x24xf32> -> vector<8x24xf32>
    %c0_15 = arith.constant 0 : index
    %c0_16 = arith.constant 0 : index
    %25 = vector.load %arg7[%c0_15, %c0_16] : memref<1x24xf32, #tpu.memory_space<vmem>>, vector<1x24xf32>
    %26 = vector.broadcast %25 : vector<1x24xf32> to vector<8x24xf32>
    %27 = arith.addf %24, %26 : vector<8x24xf32>
    %28 = vector.extract_strided_slice %27 {offsets = [0, 0], sizes = [8, 8], strides = [1, 1]} : vector<8x24xf32> to vector<8x8xf32>
    %29 = vector.extract_strided_slice %27 {offsets = [0, 8], sizes = [8, 8], strides = [1, 1]} : vector<8x24xf32> to vector<8x8xf32>
    %30 = vector.extract_strided_slice %27 {offsets = [0, 16], sizes = [8, 8], strides = [1, 1]} : vector<8x24xf32> to vector<8x8xf32>
    %31 = math.exp %30 : vector<8x8xf32>
    %cst_17 = arith.constant 5.000000e-01 : f32
    %32 = vector.broadcast %cst_17 : f32 to vector<8x8xf32>
    %33 = arith.mulf %32, %29 : vector<8x8xf32>
    %34 = math.exp %33 : vector<8x8xf32>
    %35 = arith.mulf %34, %34 : vector<8x8xf32>
    %36 = arith.mulf %2, %34 : vector<8x8xf32>
    %37 = arith.addf %28, %36 : vector<8x8xf32>
    %38 = arith.truncf %37 : vector<8x8xf32> to vector<8x8xbf16>
    %c0_18 = arith.constant 0 : index
    %c0_19 = arith.constant 0 : index
    %39 = vector.load %arg8[%c0_18, %c0_19] : memref<8x32xbf16, #tpu.memory_space<vmem>>, vector<8x32xbf16>
    %cst_20 = arith.constant dense<0.000000e+00> : vector<8x32xf32>
    %40 = tpu.matmul %38, %39, %cst_20 {dimension_numbers = #tpu.dot_dimension_numbers<[1], [0], [0], [1], [0, 0, 1, 1], [], []>} : vector<8x8xbf16>, vector<8x32xbf16>, vector<8x32xf32> -> vector<8x32xf32>
    %c0_21 = arith.constant 0 : index
    %c0_22 = arith.constant 0 : index
    %41 = vector.load %arg9[%c0_21, %c0_22] : memref<1x32xf32, #tpu.memory_space<vmem>>, vector<1x32xf32>
    %42 = vector.broadcast %41 : vector<1x32xf32> to vector<8x32xf32>
    %43 = arith.addf %40, %42 : vector<8x32xf32>
    %44 = math.tanh %43 : vector<8x32xf32>
    %cst_23 = arith.constant 1.000000e-01 : f32
    %45 = vector.broadcast %cst_23 : f32 to vector<8x32xf32>
    %46 = arith.mulf %45, %43 : vector<8x32xf32>
    %47 = arith.addf %44, %46 : vector<8x32xf32>
    %48 = arith.truncf %47 : vector<8x32xf32> to vector<8x32xbf16>
    %c0_24 = arith.constant 0 : index
    %c0_25 = arith.constant 0 : index
    %49 = vector.load %arg10[%c0_24, %c0_25] : memref<32x32xbf16, #tpu.memory_space<vmem>>, vector<32x32xbf16>
    %cst_26 = arith.constant dense<0.000000e+00> : vector<8x32xf32>
    %50 = tpu.matmul %48, %49, %cst_26 {dimension_numbers = #tpu.dot_dimension_numbers<[1], [0], [0], [1], [0, 0, 1, 1], [], []>} : vector<8x32xbf16>, vector<32x32xbf16>, vector<8x32xf32> -> vector<8x32xf32>
    %c0_27 = arith.constant 0 : index
    %c0_28 = arith.constant 0 : index
    %51 = vector.load %arg11[%c0_27, %c0_28] : memref<1x32xf32, #tpu.memory_space<vmem>>, vector<1x32xf32>
    %52 = vector.broadcast %51 : vector<1x32xf32> to vector<8x32xf32>
    %53 = arith.addf %50, %52 : vector<8x32xf32>
    %54 = math.tanh %53 : vector<8x32xf32>
    %cst_29 = arith.constant 1.000000e-01 : f32
    %55 = vector.broadcast %cst_29 : f32 to vector<8x32xf32>
    %56 = arith.mulf %55, %53 : vector<8x32xf32>
    %57 = arith.addf %54, %56 : vector<8x32xf32>
    %58 = arith.truncf %57 : vector<8x32xf32> to vector<8x32xbf16>
    %c0_30 = arith.constant 0 : index
    %c0_31 = arith.constant 0 : index
    %59 = vector.load %arg12[%c0_30, %c0_31] : memref<32x16xbf16, #tpu.memory_space<vmem>>, vector<32x16xbf16>
    %cst_32 = arith.constant dense<0.000000e+00> : vector<8x16xf32>
    %60 = tpu.matmul %58, %59, %cst_32 {dimension_numbers = #tpu.dot_dimension_numbers<[1], [0], [0], [1], [0, 0, 1, 1], [], []>} : vector<8x32xbf16>, vector<32x16xbf16>, vector<8x16xf32> -> vector<8x16xf32>
    %c0_33 = arith.constant 0 : index
    %c0_34 = arith.constant 0 : index
    %61 = vector.load %arg13[%c0_33, %c0_34] : memref<1x16xf32, #tpu.memory_space<vmem>>, vector<1x16xf32>
    %62 = vector.broadcast %61 : vector<1x16xf32> to vector<8x16xf32>
    %63 = arith.addf %60, %62 : vector<8x16xf32>
    %cst_35 = arith.constant 0.000000e+00 : f32
    %64 = vector.broadcast %cst_35 : f32 to vector<8x80xf32>
    %65 = tpu.concatenate %63, %28, %35, %37, %31, %64 in 1 : vector<8x16xf32>, vector<8x8xf32>, vector<8x8xf32>, vector<8x8xf32>, vector<8x8xf32>, vector<8x80xf32> -> vector<8x128xf32>
    %c0_36 = arith.constant 0 : index
    %c0_37 = arith.constant 0 : index
    %66 = vector.load %arg14[%c0_36, %c0_37] : memref<8x128xf32, #tpu.memory_space<vmem>>, vector<8x128xf32>
    tpu.vector_store %arg14[%c0_36, %c0_37], %65 {strides = array<i32>} : memref<8x128xf32, #tpu.memory_space<vmem>>, vector<8x128xf32>,
    return
  }
  func.func @transform_0(%arg0: i32) -> (i32, i32) {
    %c0_i32 = arith.constant 0 : i32
    %c0_i32_0 = arith.constant 0 : i32
    return %arg0, %c0_i32 : i32, i32
  }
  func.func @transform_1(%arg0: i32) -> (i32, i32) {
    %c0_i32 = arith.constant 0 : i32
    %c0_i32_0 = arith.constant 0 : i32
    %c0_i32_1 = arith.constant 0 : i32
    return %c0_i32, %c0_i32_0 : i32, i32
  }
  func.func @transform_2(%arg0: i32) -> (i32, i32) {
    %c0_i32 = arith.constant 0 : i32
    %c0_i32_0 = arith.constant 0 : i32
    %c0_i32_1 = arith.constant 0 : i32
    return %c0_i32, %c0_i32_0 : i32, i32
  }
  func.func @transform_3(%arg0: i32) -> (i32, i32) {
    %c0_i32 = arith.constant 0 : i32
    %c0_i32_0 = arith.constant 0 : i32
    %c0_i32_1 = arith.constant 0 : i32
    return %c0_i32, %c0_i32_0 : i32, i32
  }
  func.func @transform_4(%arg0: i32) -> (i32, i32) {
    %c0_i32 = arith.constant 0 : i32
    %c0_i32_0 = arith.constant 0 : i32
    %c0_i32_1 = arith.constant 0 : i32
    return %c0_i32, %c0_i32_0 : i32, i32
  }
  func.func @transform_5(%arg0: i32) -> (i32, i32) {
    %c0_i32 = arith.constant 0 : i32
    %c0_i32_0 = arith.constant 0 : i32
    %c0_i32_1 = arith.constant 0 : i32
    return %c0_i32, %c0_i32_0 : i32, i32
  }
  func.func @transform_6(%arg0: i32) -> (i32, i32) {
    %c0_i32 = arith.constant 0 : i32
    %c0_i32_0 = arith.constant 0 : i32
    %c0_i32_1 = arith.constant 0 : i32
    return %c0_i32, %c0_i32_0 : i32, i32
  }
  func.func @transform_7(%arg0: i32) -> (i32, i32) {
    %c0_i32 = arith.constant 0 : i32
    %c0_i32_0 = arith.constant 0 : i32
    %c0_i32_1 = arith.constant 0 : i32
    return %c0_i32, %c0_i32_0 : i32, i32
  }
  func.func @transform_8(%arg0: i32) -> (i32, i32) {
    %c0_i32 = arith.constant 0 : i32
    %c0_i32_0 = arith.constant 0 : i32
    %c0_i32_1 = arith.constant 0 : i32
    return %c0_i32, %c0_i32_0 : i32, i32
  }
  func.func @transform_9(%arg0: i32) -> (i32, i32) {
    %c0_i32 = arith.constant 0 : i32
    %c0_i32_0 = arith.constant 0 : i32
    %c0_i32_1 = arith.constant 0 : i32
    return %c0_i32, %c0_i32_0 : i32, i32
  }
  func.func @transform_10(%arg0: i32) -> (i32, i32) {
    %c0_i32 = arith.constant 0 : i32
    %c0_i32_0 = arith.constant 0 : i32
    %c0_i32_1 = arith.constant 0 : i32
    return %c0_i32, %c0_i32_0 : i32, i32
  }
  func.func @transform_11(%arg0: i32) -> (i32, i32) {
    %c0_i32 = arith.constant 0 : i32
    %c0_i32_0 = arith.constant 0 : i32
    %c0_i32_1 = arith.constant 0 : i32
    return %c0_i32, %c0_i32_0 : i32, i32
  }
  func.func @transform_12(%arg0: i32) -> (i32, i32) {
    %c0_i32 = arith.constant 0 : i32
    %c0_i32_0 = arith.constant 0 : i32
    %c0_i32_1 = arith.constant 0 : i32
    return %c0_i32, %c0_i32_0 : i32, i32
  }
  func.func @transform_13(%arg0: i32) -> (i32, i32) {
    %c0_i32 = arith.constant 0 : i32
    %c0_i32_0 = arith.constant 0 : i32
    return %arg0, %c0_i32 : i32, i32
  }
}

</mosaic_0001>

<llo_original>
// kernel: clean_ivae_forward.1
$region0: #{clean_ivae_forward.1}
  #allocation0 [shape = 'u32[]', space=smem, size = 0x4, offset = 0x4, fixed_abs, tag = 'smem constant byte address 0x4 - core index']
  #allocation1 [shape = 'u32[144,128]{1,0:T(1,128)}', space=vmem, size = 0x12000, scoped, tag = 'internal scratch']
  %s0 = inlined_call_operand.vmem [shape: f32[8,128], index: 0, kind: input, shape index: {}]
  %s1 = inlined_call_operand.vmem [shape: bf16[128,96], index: 1, kind: input, shape index: {}]
  %s2 = inlined_call_operand.vmem [shape: f32[1,96], index: 2, kind: input, shape index: {}]
  %s3 = inlined_call_operand.vmem [shape: bf16[96,96], index: 3, kind: input, shape index: {}]
  %s4 = inlined_call_operand.vmem [shape: f32[1,96], index: 4, kind: input, shape index: {}]
  %s5 = inlined_call_operand.vmem [shape: bf16[96,24], index: 5, kind: input, shape index: {}]
  %s6 = inlined_call_operand.vmem [shape: f32[1,24], index: 6, kind: input, shape index: {}]
  %s7 = inlined_call_operand.vmem [shape: bf16[8,32], index: 7, kind: input, shape index: {}]
  %s8 = inlined_call_operand.vmem [shape: f32[1,32], index: 8, kind: input, shape index: {}]
  %s9 = inlined_call_operand.vmem [shape: bf16[32,32], index: 9, kind: input, shape index: {}]
  %s10 = inlined_call_operand.vmem [shape: f32[1,32], index: 10, kind: input, shape index: {}]
  %s11 = inlined_call_operand.vmem [shape: bf16[32,16], index: 11, kind: input, shape index: {}]
  %s12 = inlined_call_operand.vmem [shape: f32[1,16], index: 12, kind: input, shape index: {}]
  %s13 = inlined_call_operand.vmem [shape: f32[8,128], index: 13, kind: output, shape index: {}]
  %s14 = sld [smem:[#allocation0]]
  $region62: #{clean_ivae_forward.1} parent=0
    _
  %s16 = ssub.s32 1, %s14
  %s17 = scalar_select 0, %s16, %s14
  // Predicated region
  $region2: #{clean_ivae_forward.1} parent=0 // pred_check
    _
  $region3: #{clean_ivae_forward.1} parent=0 // pred_check_branch
    %19 = sbr.rel (0) target = $region5
  $region4: #{clean_ivae_forward.1} parent=0 // pred_region
    _
  $region5: #{clean_ivae_forward.1} parent=0 // pred_fallthru
    _
  // Predicated region
  $region6: #{clean_ivae_forward.1} parent=0 // pred_check
    _
  $region7: #{clean_ivae_forward.1} parent=0 // pred_check_branch
    %21 = sbr.rel (0) target = $region9
  $region8: #{clean_ivae_forward.1} parent=0 // pred_region
    _
  $region9: #{clean_ivae_forward.1} parent=0 // pred_fallthru
    _
  // Predicated region
  $region10: #{clean_ivae_forward.1} parent=0 // pred_check
    _
  $region11: #{clean_ivae_forward.1} parent=0 // pred_check_branch
    %23 = sbr.rel (0) target = $region13
  $region12: #{clean_ivae_forward.1} parent=0 // pred_region
    _
  $region13: #{clean_ivae_forward.1} parent=0 // pred_fallthru
    _
  // Predicated region
  $region14: #{clean_ivae_forward.1} parent=0 // pred_check
    _
  $region15: #{clean_ivae_forward.1} parent=0 // pred_check_branch
    %25 = sbr.rel (0) target = $region17
  $region16: #{clean_ivae_forward.1} parent=0 // pred_region
    _
  $region17: #{clean_ivae_forward.1} parent=0 // pred_fallthru
    _
  // Predicated region
  $region18: #{clean_ivae_forward.1} parent=0 // pred_check
    _
  $region19: #{clean_ivae_forward.1} parent=0 // pred_check_branch
    %27 = sbr.rel (0) target = $region21
  $region20: #{clean_ivae_forward.1} parent=0 // pred_region
    _
  $region21: #{clean_ivae_forward.1} parent=0 // pred_fallthru
    _
  // Predicated region
  $region22: #{clean_ivae_forward.1} parent=0 // pred_check
    _
  $region23: #{clean_ivae_forward.1} parent=0 // pred_check_branch
    %29 = sbr.rel (0) target = $region25
  $region24: #{clean_ivae_forward.1} parent=0 // pred_region
    _
  $region25: #{clean_ivae_forward.1} parent=0 // pred_fallthru
    _
  // Predicated region
  $region26: #{clean_ivae_forward.1} parent=0 // pred_check
    _
  $region27: #{clean_ivae_forward.1} parent=0 // pred_check_branch
    %31 = sbr.rel (0) target = $region29
  $region28: #{clean_ivae_forward.1} parent=0 // pred_region
    _
  $region29: #{clean_ivae_forward.1} parent=0 // pred_fallthru
    _
  // Predicated region
  $region30: #{clean_ivae_forward.1} parent=0 // pred_check
    _
  $region31: #{clean_ivae_forward.1} parent=0 // pred_check_branch
    %33 = sbr.rel (0) target = $region33
  $region32: #{clean_ivae_forward.1} parent=0 // pred_region
    _
  $region33: #{clean_ivae_forward.1} parent=0 // pred_fallthru
    _
  // Predicated region
  $region34: #{clean_ivae_forward.1} parent=0 // pred_check
    _
  $region35: #{clean_ivae_forward.1} parent=0 // pred_check_branch
    %35 = sbr.rel (0) target = $region37
  $region36: #{clean_ivae_forward.1} parent=0 // pred_region
    _
  $region37: #{clean_ivae_forward.1} parent=0 // pred_fallthru
    _
  // Predicated region
  $region38: #{clean_ivae_forward.1} parent=0 // pred_check
    _
  $region39: #{clean_ivae_forward.1} parent=0 // pred_check_branch
    %37 = sbr.rel (0) target = $region41
  $region40: #{clean_ivae_forward.1} parent=0 // pred_region
    _
  $region41: #{clean_ivae_forward.1} parent=0 // pred_fallthru
    _
  // Predicated region
  $region42: #{clean_ivae_forward.1} parent=0 // pred_check
    _
  $region43: #{clean_ivae_forward.1} parent=0 // pred_check_branch
    %39 = sbr.rel (0) target = $region45
  $region44: #{clean_ivae_forward.1} parent=0 // pred_region
    _
  $region45: #{clean_ivae_forward.1} parent=0 // pred_fallthru
    _
  // Predicated region
  $region46: #{clean_ivae_forward.1} parent=0 // pred_check
    _
  $region47: #{clean_ivae_forward.1} parent=0 // pred_check_branch
    %41 = sbr.rel (0) target = $region49
  $region48: #{clean_ivae_forward.1} parent=0 // pred_region
    _
  $region49: #{clean_ivae_forward.1} parent=0 // pred_fallthru
    _
  // Predicated region
  $region50: #{clean_ivae_forward.1} parent=0 // pred_check
    _
  $region51: #{clean_ivae_forward.1} parent=0 // pred_check_branch
    %43 = sbr.rel (0) target = $region53
  $region52: #{clean_ivae_forward.1} parent=0 // pred_region
    _
  $region53: #{clean_ivae_forward.1} parent=0 // pred_fallthru
    _
  %v45 = vld [vmem:[%s0] sm:$0xff]
  %v46 = vpack.c.bf16 %v45, %v45
  %v47 = vld [vmem:[%s1] sm:$0xf]
  %v48 = vld [vmem:[%s1 + $0x4] sm:$0xf]
  %v49 = vld [vmem:[%s1 + $0x8] sm:$0xf]
  %v50 = vld [vmem:[%s1 + $0xc] sm:$0xf]
  %v51 = vld [vmem:[%s1 + $0x10] sm:$0xf]
  %v52 = vld [vmem:[%s1 + $0x14] sm:$0xf]
  %v53 = vld [vmem:[%s1 + $0x18] sm:$0xf]
  %v54 = vld [vmem:[%s1 + $0x1c] sm:$0xf]
  %v55 = vld [vmem:[%s1 + $0x20] sm:$0xf]
  %v56 = vld [vmem:[%s1 + $0x24] sm:$0xf]
  %v57 = vld [vmem:[%s1 + $0x28] sm:$0xf]
  %v58 = vld [vmem:[%s1 + $0x2c] sm:$0xf]
  %v59 = vld [vmem:[%s1 + $0x30] sm:$0xf]
  %v60 = vld [vmem:[%s1 + $0x34] sm:$0xf]
  %v61 = vld [vmem:[%s1 + $0x38] sm:$0xf]
  %v62 = vld [vmem:[%s1 + $0x3c] sm:$0xf]
  %v63 = vld [vmem:[%s2] sm:$0x1]
  %v65 = vlaneseq
  %v66 = vshrl.u32 %v65, 7
  %v67 = vsub.s32 0, %v66
  %v68 = vrot.slane %v63, %v67
  %v86 = vunpack.c.l.b16 %v47
  %v87 = vunpack.c.l.b16 %v48
  %v88 = vunpack.c.l.b16 %v49
  %v89 = vunpack.c.l.b16 %v50
  %v90 = vunpack.c.l.b16 %v51
  %v91 = vunpack.c.l.b16 %v52
  %v92 = vunpack.c.l.b16 %v53
  %v93 = vunpack.c.l.b16 %v54
  %v94 = vunpack.c.l.b16 %v55
  %v95 = vunpack.c.l.b16 %v56
  %v96 = vunpack.c.l.b16 %v57
  %v97 = vunpack.c.l.b16 %v58
  %v98 = vunpack.c.l.b16 %v59
  %v99 = vunpack.c.l.b16 %v60
  %v100 = vunpack.c.l.b16 %v61
  %v101 = vunpack.c.l.b16 %v62
  %v102 = vpack.c.b16 %v87, %v86
  %v103 = vpack.c.b16 %v89, %v88
  %v104 = vpack.c.b16 %v91, %v90
  %v105 = vpack.c.b16 %v93, %v92
  %v106 = vpack.c.b16 %v95, %v94
  %v107 = vpack.c.b16 %v97, %v96
  %v108 = vpack.c.b16 %v99, %v98
  %v109 = vpack.c.b16 %v101, %v100
  %118 = vmatprep.subr.bf16.mxu0 0
  %119 = vmatpush1.bf16.msra.mxu0 %v102
  %120 = vmatprep.subr.bf16.mxu0 0
  %121 = vmatpush1.bf16.msra.mxu0 %v103
  %122 = vmatprep.subr.bf16.mxu0 0
  %123 = vmatpush1.bf16.msra.mxu0 %v104
  %124 = vmatprep.subr.bf16.mxu0 0
  %125 = vmatpush1.bf16.msra.mxu0 %v105
  %126 = vmatprep.subr.bf16.mxu0 0
  %127 = vmatpush1.bf16.msra.mxu0 %v106
  %128 = vmatprep.subr.bf16.mxu0 0
  %129 = vmatpush1.bf16.msra.mxu0 %v107
  %130 = vmatprep.subr.bf16.mxu0 0
  %131 = vmatpush1.bf16.msra.mxu0 %v108
  %132 = vmatprep.subr.bf16.mxu0 0
  %133 = vmatpush1.bf16.msra.mxu0 %v109
  %134 = vmatprep.subr.bf16.mxu0 0
  %135 = vmatpush1.bf16.msra.mxu0 0
  %136 = vmatprep.subr.bf16.mxu0 0
  %137 = vmatpush1.bf16.msra.mxu0 0
  %138 = vmatprep.subr.bf16.mxu0 0
  %139 = vmatpush1.bf16.msra.mxu0 0
  %140 = vmatprep.subr.bf16.mxu0 0
  %141 = vmatpush1.bf16.msra.mxu0 0
  %142 = vmatprep.subr.bf16.mxu0 0
  %143 = vmatpush1.bf16.msra.mxu0 0
  %144 = vmatprep.subr.bf16.mxu0 0
  %145 = vmatpush1.bf16.msra.mxu0 0
  %146 = vmatprep.subr.bf16.mxu0 0
  %147 = vmatpush1.bf16.msra.mxu0 0
  %148 = vmatprep.subr.bf16.mxu0 0
  %149 = vmatpush1.bf16.msra.mxu0 0
  %150 = vmatprep.mubr.bf16.mxu0 0
  %151 = vmatmul.mubr.bf16.gmra.mrb[0].mxu0 %v46
  %v152 = vpop.f32.mrb[0].mxu0
  %v153 = vadd.f32 %v68, %v152
  %v154 = vpop.f32.mrb[0].mxu0
  %v155 = vpop.f32.mrb[0].mxu0
  %v156 = vpop.f32.mrb[0].mxu0
  %157 = vdwg.mxu0
  %v158 = vtanh.pop %v153
  %v159 = vmul.f32 %v153, 0.1
  %v160 = vadd.f32 %v158, %v159
  %v161 = vpack.c.bf16 %v160, %v160
  %v162 = vld [vmem:[%s3] sm:$0xf]
  %v163 = vld [vmem:[%s3 + $0x4] sm:$0xf]
  %v164 = vld [vmem:[%s3 + $0x8] sm:$0xf]
  %v165 = vld [vmem:[%s3 + $0xc] sm:$0xf]
  %v166 = vld [vmem:[%s3 + $0x10] sm:$0xf]
  %v167 = vld [vmem:[%s3 + $0x14] sm:$0xf]
  %v168 = vld [vmem:[%s3 + $0x18] sm:$0xf]
  %v169 = vld [vmem:[%s3 + $0x1c] sm:$0xf]
  %v170 = vld [vmem:[%s3 + $0x20] sm:$0xf]
  %v171 = vld [vmem:[%s3 + $0x24] sm:$0xf]
  %v172 = vld [vmem:[%s3 + $0x28] sm:$0xf]
  %v173 = vld [vmem:[%s3 + $0x2c] sm:$0xf]
  %v174 = vld [vmem:[%s4] sm:$0x1]
  %v176 = vlaneseq
  %v177 = vshrl.u32 %v176, 7
  %v178 = vsub.s32 0, %v177
  %v179 = vrot.slane %v174, %v178
  %v193 = vunpack.c.l.b16 %v162
  %v194 = vunpack.c.l.b16 %v163
  %v195 = vunpack.c.l.b16 %v164
  %v196 = vunpack.c.l.b16 %v165
  %v197 = vunpack.c.l.b16 %v166
  %v198 = vunpack.c.l.b16 %v167
  %v199 = vunpack.c.l.b16 %v168
  %v200 = vunpack.c.l.b16 %v169
  %v201 = vunpack.c.l.b16 %v170
  %v202 = vunpack.c.l.b16 %v171
  %v203 = vunpack.c.l.b16 %v172
  %v204 = vunpack.c.l.b16 %v173
  %v205 = vpack.c.b16 %v194, %v193
  %v206 = vpack.c.b16 %v196, %v195
  %v207 = vpack.c.b16 %v198, %v197
  %v208 = vpack.c.b16 %v200, %v199
  %v209 = vpack.c.b16 %v202, %v201
  %v210 = vpack.c.b16 %v204, %v203
  %vm217 = vcmask 785408
  %v219 = vsel %vm217, %v161, 0
  %221 = vmatprep.subr.bf16.mxu0 0
  %222 = vmatpush1.bf16.msra.mxu0 %v205
  %223 = vmatprep.subr.bf16.mxu0 0
  %224 = vmatpush1.bf16.msra.mxu0 %v206
  %225 = vmatprep.subr.bf16.mxu0 0
  %226 = vmatpush1.bf16.msra.mxu0 %v207
  %227 = vmatprep.subr.bf16.mxu0 0
  %228 = vmatpush1.bf16.msra.mxu0 %v208
  %229 = vmatprep.subr.bf16.mxu0 0
  %230 = vmatpush1.bf16.msra.mxu0 %v209
  %231 = vmatprep.subr.bf16.mxu0 0
  %232 = vmatpush1.bf16.msra.mxu0 %v210
  %233 = vmatprep.subr.bf16.mxu0 0
  %234 = vmatpush1.bf16.msra.mxu0 0
  %235 = vmatprep.subr.bf16.mxu0 0
  %236 = vmatpush1.bf16.msra.mxu0 0
  %237 = vmatprep.subr.bf16.mxu0 0
  %238 = vmatpush1.bf16.msra.mxu0 0
  %239 = vmatprep.subr.bf16.mxu0 0
  %240 = vmatpush1.bf16.msra.mxu0 0
  %241 = vmatprep.subr.bf16.mxu0 0
  %242 = vmatpush1.bf16.msra.mxu0 0
  %243 = vmatprep.subr.bf16.mxu0 0
  %244 = vmatpush1.bf16.msra.mxu0 0
  %245 = vmatprep.subr.bf16.mxu0 0
  %246 = vmatpush1.bf16.msra.mxu0 0
  %247 = vmatprep.subr.bf16.mxu0 0
  %248 = vmatpush1.bf16.msra.mxu0 0
  %249 = vmatprep.subr.bf16.mxu0 0
  %250 = vmatpush1.bf16.msra.mxu0 0
  %251 = vmatprep.subr.bf16.mxu0 0
  %252 = vmatpush1.bf16.msra.mxu0 0
  %253 = vmatprep.mubr.bf16.mxu0 0
  %254 = vmatmul.mubr.bf16.gmra.mrb[0].mxu0 %v219
  %v255 = vpop.f32.mrb[0].mxu0
  %v256 = vadd.f32 %v179, %v255
  %v257 = vpop.f32.mrb[0].mxu0
  %v258 = vpop.f32.mrb[0].mxu0
  %v259 = vpop.f32.mrb[0].mxu0
  %260 = vdwg.mxu0
  %v261 = vtanh.pop %v256
  %v262 = vmul.f32 %v256, 0.1
  %v263 = vadd.f32 %v261, %v262
  %v264 = vpack.c.bf16 %v263, %v263
  %v265 = vld [vmem:[%s5] sm:$0xf]
  %v266 = vld [vmem:[%s5 + $0x4] sm:$0xf]
  %v267 = vld [vmem:[%s5 + $0x8] sm:$0xf]
  %v268 = vld [vmem:[%s5 + $0xc] sm:$0xf]
  %v269 = vld [vmem:[%s5 + $0x10] sm:$0xf]
  %v270 = vld [vmem:[%s5 + $0x14] sm:$0xf]
  %v271 = vld [vmem:[%s5 + $0x18] sm:$0xf]
  %v272 = vld [vmem:[%s5 + $0x1c] sm:$0xf]
  %v273 = vld [vmem:[%s5 + $0x20] sm:$0xf]
  %v274 = vld [vmem:[%s5 + $0x24] sm:$0xf]
  %v275 = vld [vmem:[%s5 + $0x28] sm:$0xf]
  %v276 = vld [vmem:[%s5 + $0x2c] sm:$0xf]
  %v277 = vld [vmem:[%s6] sm:$0x1]
  %v279 = vlaneseq
  %v280 = vshrl.u32 %v279, 7
  %v281 = vsub.s32 0, %v280
  %v282 = vrot.slane %v277, %v281
  %v296 = vunpack.c.l.b16 %v265
  %v297 = vunpack.c.l.b16 %v266
  %v298 = vunpack.c.l.b16 %v267
  %v299 = vunpack.c.l.b16 %v268
  %v300 = vunpack.c.l.b16 %v269
  %v301 = vunpack.c.l.b16 %v270
  %v302 = vunpack.c.l.b16 %v271
  %v303 = vunpack.c.l.b16 %v272
  %v304 = vunpack.c.l.b16 %v273
  %v305 = vunpack.c.l.b16 %v274
  %v306 = vunpack.c.l.b16 %v275
  %v307 = vunpack.c.l.b16 %v276
  %v308 = vpack.c.b16 %v297, %v296
  %v309 = vpack.c.b16 %v299, %v298
  %v310 = vpack.c.b16 %v301, %v300
  %v311 = vpack.c.b16 %v303, %v302
  %v312 = vpack.c.b16 %v305, %v304
  %v313 = vpack.c.b16 %v307, %v306
  %v321 = vsel %vm217, %v264, 0
  %323 = vmatprep.subr.bf16.mxu0 0
  %324 = vmatpush1.bf16.msra.mxu0 %v308
  %325 = vmatprep.subr.bf16.mxu0 0
  %326 = vmatpush1.bf16.msra.mxu0 %v309
  %327 = vmatprep.subr.bf16.mxu0 0
  %328 = vmatpush1.bf16.msra.mxu0 %v310
  %329 = vmatprep.subr.bf16.mxu0 0
  %330 = vmatpush1.bf16.msra.mxu0 %v311
  %331 = vmatprep.subr.bf16.mxu0 0
  %332 = vmatpush1.bf16.msra.mxu0 %v312
  %333 = vmatprep.subr.bf16.mxu0 0
  %334 = vmatpush1.bf16.msra.mxu0 %v313
  %335 = vmatprep.subr.bf16.mxu0 0
  %336 = vmatpush1.bf16.msra.mxu0 0
  %337 = vmatprep.subr.bf16.mxu0 0
  %338 = vmatpush1.bf16.msra.mxu0 0
  %339 = vmatprep.subr.bf16.mxu0 0
  %340 = vmatpush1.bf16.msra.mxu0 0
  %341 = vmatprep.subr.bf16.mxu0 0
  %342 = vmatpush1.bf16.msra.mxu0 0
  %343 = vmatprep.subr.bf16.mxu0 0
  %344 = vmatpush1.bf16.msra.mxu0 0
  %345 = vmatprep.subr.bf16.mxu0 0
  %346 = vmatpush1.bf16.msra.mxu0 0
  %347 = vmatprep.subr.bf16.mxu0 0
  %348 = vmatpush1.bf16.msra.mxu0 0
  %349 = vmatprep.subr.bf16.mxu0 0
  %350 = vmatpush1.bf16.msra.mxu0 0
  %351 = vmatprep.subr.bf16.mxu0 0
  %352 = vmatpush1.bf16.msra.mxu0 0
  %353 = vmatprep.subr.bf16.mxu0 0
  %354 = vmatpush1.bf16.msra.mxu0 0
  %355 = vmatprep.mubr.bf16.mxu0 0
  %356 = vmatmul.mubr.bf16.gmra.mrb[0].mxu0 %v321
  %v357 = vpop.f32.mrb[0].mxu0
  %v358 = vadd.f32 %v282, %v357
  %v359 = vpop.f32.mrb[0].mxu0
  %v360 = vpop.f32.mrb[0].mxu0
  %v361 = vpop.f32.mrb[0].mxu0
  %362 = vdwg.mxu0
  %v363 = vmul.f32 %v358, 1.442695
  %v364 = vpow.pop %v363
  %v365 = vmul.f32 %v358, 0.5
  %v366 = vmul.f32 %v365, 1.442695
  %v367 = vpow.pop %v366
  %v368 = vmul.f32 %v367, %v367
  %370 = vrot.lane.b32.xlu0 %v367, 12
  %v371 = vpop.permute.xlu0 %370
  %v373 = vmul.f32 %v45, %v371
  %375 = vrot.lane.b32.xlu0 %v373, 108
  %v376 = vpop.permute.xlu0 %375
  %v378 = vadd.f32 %v358, %v376
  %v379 = vpack.c.bf16 %v378, %v378
  %v380 = vld [vmem:[%s7] sm:$0xf]
  %v381 = vld [vmem:[%s8] sm:$0x1]
  %v383 = vlaneseq
  %v384 = vshrl.u32 %v383, 7
  %v385 = vsub.s32 0, %v384
  %v386 = vrot.slane %v381, %v385
  %vm388 = vcmask 64512
  %v390 = vsel %vm388, %v379, 0
  %vm392 = vcmask 1043456
  %v394 = vsel %vm392, %v380, 0
  %396 = vmatprep.subr.bf16.mxu0 0
  %397 = vmatpush1.bf16.msra.mxu0 %v394
  %398 = vmatprep.subr.bf16.mxu0 0
  %399 = vmatpush1.bf16.msra.mxu0 0
  %400 = vmatprep.subr.bf16.mxu0 0
  %401 = vmatpush1.bf16.msra.mxu0 0
  %402 = vmatprep.subr.bf16.mxu0 0
  %403 = vmatpush1.bf16.msra.mxu0 0
  %404 = vmatprep.subr.bf16.mxu0 0
  %405 = vmatpush1.bf16.msra.mxu0 0
  %406 = vmatprep.subr.bf16.mxu0 0
  %407 = vmatpush1.bf16.msra.mxu0 0
  %408 = vmatprep.subr.bf16.mxu0 0
  %409 = vmatpush1.bf16.msra.mxu0 0
  %410 = vmatprep.subr.bf16.mxu0 0
  %411 = vmatpush1.bf16.msra.mxu0 0
  %412 = vmatprep.subr.bf16.mxu0 0
  %413 = vmatpush1.bf16.msra.mxu0 0
  %414 = vmatprep.subr.bf16.mxu0 0
  %415 = vmatpush1.bf16.msra.mxu0 0
  %416 = vmatprep.subr.bf16.mxu0 0
  %417 = vmatpush1.bf16.msra.mxu0 0
  %418 = vmatprep.subr.bf16.mxu0 0
  %419 = vmatpush1.bf16.msra.mxu0 0
  %420 = vmatprep.subr.bf16.mxu0 0
  %421 = vmatpush1.bf16.msra.mxu0 0
  %422 = vmatprep.subr.bf16.mxu0 0
  %423 = vmatpush1.bf16.msra.mxu0 0
  %424 = vmatprep.subr.bf16.mxu0 0
  %425 = vmatpush1.bf16.msra.mxu0 0
  %426 = vmatprep.subr.bf16.mxu0 0
  %427 = vmatpush1.bf16.msra.mxu0 0
  %428 = vmatprep.mubr.bf16.mxu0 0
  %429 = vmatmul.mubr.bf16.gmra.mrb[0].mxu0 %v390
  %v430 = vpop.f32.mrb[0].mxu0
  %v431 = vadd.f32 %v386, %v430
  %v432 = vpop.f32.mrb[0].mxu0
  %v433 = vpop.f32.mrb[0].mxu0
  %v434 = vpop.f32.mrb[0].mxu0
  %435 = vdwg.mxu0
  %v436 = vtanh.pop %v431
  %v437 = vmul.f32 %v431, 0.1
  %v438 = vadd.f32 %v436, %v437
  %v439 = vpack.c.bf16 %v438, %v438
  %v440 = vld [vmem:[%s9] sm:$0xf]
  %v441 = vld [vmem:[%s9 + $0x4] sm:$0xf]
  %v442 = vld [vmem:[%s9 + $0x8] sm:$0xf]
  %v443 = vld [vmem:[%s9 + $0xc] sm:$0xf]
  %v444 = vld [vmem:[%s10] sm:$0x1]
  %v446 = vlaneseq
  %v447 = vshrl.u32 %v446, 7
  %v448 = vsub.s32 0, %v447
  %v449 = vrot.slane %v444, %v448
  %v455 = vunpack.c.l.b16 %v440
  %v456 = vunpack.c.l.b16 %v441
  %v457 = vunpack.c.l.b16 %v442
  %v458 = vunpack.c.l.b16 %v443
  %v459 = vpack.c.b16 %v456, %v455
  %v460 = vpack.c.b16 %v458, %v457
  %vm463 = vcmask 261120
  %v465 = vsel %vm463, %v439, 0
  %467 = vmatprep.subr.bf16.mxu0 0
  %468 = vmatpush1.bf16.msra.mxu0 %v459
  %469 = vmatprep.subr.bf16.mxu0 0
  %470 = vmatpush1.bf16.msra.mxu0 %v460
  %471 = vmatprep.subr.bf16.mxu0 0
  %472 = vmatpush1.bf16.msra.mxu0 0
  %473 = vmatprep.subr.bf16.mxu0 0
  %474 = vmatpush1.bf16.msra.mxu0 0
  %475 = vmatprep.subr.bf16.mxu0 0
  %476 = vmatpush1.bf16.msra.mxu0 0
  %477 = vmatprep.subr.bf16.mxu0 0
  %478 = vmatpush1.bf16.msra.mxu0 0
  %479 = vmatprep.subr.bf16.mxu0 0
  %480 = vmatpush1.bf16.msra.mxu0 0
  %481 = vmatprep.subr.bf16.mxu0 0
  %482 = vmatpush1.bf16.msra.mxu0 0
  %483 = vmatprep.subr.bf16.mxu0 0
  %484 = vmatpush1.bf16.msra.mxu0 0
  %485 = vmatprep.subr.bf16.mxu0 0
  %486 = vmatpush1.bf16.msra.mxu0 0
  %487 = vmatprep.subr.bf16.mxu0 0
  %488 = vmatpush1.bf16.msra.mxu0 0
  %489 = vmatprep.subr.bf16.mxu0 0
  %490 = vmatpush1.bf16.msra.mxu0 0
  %491 = vmatprep.subr.bf16.mxu0 0
  %492 = vmatpush1.bf16.msra.mxu0 0
  %493 = vmatprep.subr.bf16.mxu0 0
  %494 = vmatpush1.bf16.msra.mxu0 0
  %495 = vmatprep.subr.bf16.mxu0 0
  %496 = vmatpush1.bf16.msra.mxu0 0
  %497 = vmatprep.subr.bf16.mxu0 0
  %498 = vmatpush1.bf16.msra.mxu0 0
  %499 = vmatprep.mubr.bf16.mxu0 0
  %500 = vmatmul.mubr.bf16.gmra.mrb[0].mxu0 %v465
  %v501 = vpop.f32.mrb[0].mxu0
  %v502 = vadd.f32 %v449, %v501
  %v503 = vpop.f32.mrb[0].mxu0
  %v504 = vpop.f32.mrb[0].mxu0
  %v505 = vpop.f32.mrb[0].mxu0
  %506 = vdwg.mxu0
  %v507 = vtanh.pop %v502
  %v508 = vmul.f32 %v502, 0.1
  %v509 = vadd.f32 %v507, %v508
  %v510 = vpack.c.bf16 %v509, %v509
  %v511 = vld [vmem:[%s11] sm:$0xf]
  %v512 = vld [vmem:[%s11 + $0x4] sm:$0xf]
  %v513 = vld [vmem:[%s11 + $0x8] sm:$0xf]
  %v514 = vld [vmem:[%s11 + $0xc] sm:$0xf]
  %v515 = vld [vmem:[%s12] sm:$0x1]
  %v517 = vlaneseq
  %v518 = vshrl.u32 %v517, 7
  %v519 = vsub.s32 0, %v518
  %v520 = vrot.slane %v515, %v519
  %v526 = vunpack.c.l.b16 %v511
  %v527 = vunpack.c.l.b16 %v512
  %v528 = vunpack.c.l.b16 %v513
  %v529 = vunpack.c.l.b16 %v514
  %v530 = vpack.c.b16 %v527, %v526
  %v531 = vpack.c.b16 %v529, %v528
  %v535 = vsel %vm463, %v510, 0
  %537 = vmatprep.subr.bf16.mxu0 0
  %538 = vmatpush1.bf16.msra.mxu0 %v530
  %539 = vmatprep.subr.bf16.mxu0 0
  %540 = vmatpush1.bf16.msra.mxu0 %v531
  %541 = vmatprep.subr.bf16.mxu0 0
  %542 = vmatpush1.bf16.msra.mxu0 0
  %543 = vmatprep.subr.bf16.mxu0 0
  %544 = vmatpush1.bf16.msra.mxu0 0
  %545 = vmatprep.subr.bf16.mxu0 0
  %546 = vmatpush1.bf16.msra.mxu0 0
  %547 = vmatprep.subr.bf16.mxu0 0
  %548 = vmatpush1.bf16.msra.mxu0 0
  %549 = vmatprep.subr.bf16.mxu0 0
  %550 = vmatpush1.bf16.msra.mxu0 0
  %551 = vmatprep.subr.bf16.mxu0 0
  %552 = vmatpush1.bf16.msra.mxu0 0
  %553 = vmatprep.subr.bf16.mxu0 0
  %554 = vmatpush1.bf16.msra.mxu0 0
  %555 = vmatprep.subr.bf16.mxu0 0
  %556 = vmatpush1.bf16.msra.mxu0 0
  %557 = vmatprep.subr.bf16.mxu0 0
  %558 = vmatpush1.bf16.msra.mxu0 0
  %559 = vmatprep.subr.bf16.mxu0 0
  %560 = vmatpush1.bf16.msra.mxu0 0
  %561 = vmatprep.subr.bf16.mxu0 0
  %562 = vmatpush1.bf16.msra.mxu0 0
  %563 = vmatprep.subr.bf16.mxu0 0
  %564 = vmatpush1.bf16.msra.mxu0 0
  %565 = vmatprep.subr.bf16.mxu0 0
  %566 = vmatpush1.bf16.msra.mxu0 0
  %567 = vmatprep.subr.bf16.mxu0 0
  %568 = vmatpush1.bf16.msra.mxu0 0
  %569 = vmatprep.mubr.bf16.mxu0 0
  %570 = vmatmul.mubr.bf16.gmra.mrb[0].mxu0 %v535
  %v571 = vpop.f32.mrb[0].mxu0
  %v572 = vadd.f32 %v520, %v571
  %v573 = vpop.f32.mrb[0].mxu0
  %v574 = vpop.f32.mrb[0].mxu0
  %v575 = vpop.f32.mrb[0].mxu0
  %576 = vdwg.mxu0
  %578 = vrot.lane.b32.xlu0 %v358, 16
  %v579 = vpop.permute.xlu0 %578
  %582 = vrot.lane.b32.xlu0 %v368, 16
  %v583 = vpop.permute.xlu0 %582
  %586 = vrot.lane.b32.xlu0 %v378, 32
  %v587 = vpop.permute.xlu0 %586
  %590 = vrot.lane.b32.xlu0 %v364, 24
  %v591 = vpop.permute.xlu0 %590
  %vm593 = vcmask 130048
  %v594 = vsel %vm593, %v572, %v579
  %vm595 = vcmask 195584
  %v596 = vsel %vm595, %v594, %v583
  %v597 = vsel %vm463, %v596, %v587
  %vm598 = vcmask 326656
  %v599 = vsel %vm598, %v597, %v591
  %vm600 = vcmask 392192
  %v601 = vsel %vm600, %v599, 0.0
  %602 = vst [vmem:[%s13] sm:$0xff] %v601
  // Predicated region
  $region54: #{clean_ivae_forward.1} parent=0 // pred_check
    _
  $region55: #{clean_ivae_forward.1} parent=0 // pred_check_branch
    %604 = sbr.rel (0) target = $region57
  $region56: #{clean_ivae_forward.1} parent=0 // pred_region
    _
  $region57: #{clean_ivae_forward.1} parent=0 // pred_fallthru
    _
  // Predicated region
  $region58: #{clean_ivae_forward.1} parent=0 // pred_check
    _
  $region59: #{clean_ivae_forward.1} parent=0 // pred_check_branch
    %606 = sbr.rel (0) target = $region61
  $region60: #{clean_ivae_forward.1} parent=0 // pred_region
    _
  $region61: #{clean_ivae_forward.1} parent=0 // pred_fallthru
    _

</llo_original>
